<compile_context>
chip_gen: v5e
topology: v5e:2x2
jax: 0.10.0
libtpu: 0.0.40
codegen_flags: <defaults>
</compile_context>

<pallas_src>
import functools

import jax
import jax.numpy as jnp
import numpy as np
from jax.experimental import pallas as pl
from jax.experimental.pallas import tpu as pltpu


def _linear_classifier_kernel(patch_ref, cls_ref, w_ref, b_ref, out_ref,
                              feats_ref, *, embed_dim):
    # patch_ref: [B, N, D]   cls_ref: [B, D]
    # w_ref:     [2D, TN]    b_ref:   [1, TN]
    # out_ref:   [B, TN]     feats_ref (VMEM scratch): [B, 2D] f32
    #
    # Build the fused feature slab once (first grid step only). It remains
    # resident in VMEM scratch across all class tiles.
    @pl.when(pl.program_id(0) == 0)
    def _():
        feats_ref[:, :embed_dim] = cls_ref[...].astype(jnp.float32)
        # 1/N mean scale is folded into the patch half of the weight at
        # parameter-prep time, so a plain token sum suffices here.
        feats_ref[:, embed_dim:] = jnp.sum(
            patch_ref[...].astype(jnp.float32), axis=1)

    # Single fused K=2*D matmul per class tile + bias add.
    out_ref[...] = (
        jnp.dot(feats_ref[...], w_ref[...],
                preferred_element_type=jnp.float32)
        + b_ref[...]
    ).astype(out_ref.dtype)


def prepare_linear_classifier_params(weight, bias, num_patch_tokens):
    """One-time parameter prep (call at model init, NOT in the per-call path).

    weight: [num_classes, 2*embed_dim]  (PyTorch nn.Linear layout)
    bias:   [num_classes]
    Returns:
      w_fused: [2*embed_dim, num_classes]  transposed weight with the 1/N
               token-mean scale folded into the patch half.
      bias2d:  [1, num_classes]
    """
    C, two_d = weight.shape
    assert two_d % 2 == 0
    D = two_d // 2
    w_t = jnp.transpose(weight).astype(jnp.float32)            # [2D, C]
    scale = jnp.concatenate(
        [jnp.ones((D, 1), jnp.float32),
         jnp.full((D, 1), 1.0 / num_patch_tokens, jnp.float32)],
        axis=0)                                                 # [2D, 1]
    w_fused = w_t * scale
    bias2d = bias.reshape(1, C).astype(jnp.float32)
    return w_fused, bias2d


def linear_classifier(patch_tokens, class_token, w_fused, bias2d, *, tn=None):
    """Pallas equivalent of LinearClassifier(use_avgpool=True, use_class=True).

    patch_tokens: [B, N, D]
    class_token:  [B, D]
    w_fused:      [2*D, C]  (from prepare_linear_classifier_params)
    bias2d:       [1, C]
    returns:      [B, C] float32
    """
    B, N, D = patch_tokens.shape
    two_d, C = w_fused.shape
    assert two_d == 2 * D
    assert class_token.shape == (B, D)
    assert bias2d.shape == (1, C)

    if tn is None:
        # Single grid step when the full weight comfortably fits in VMEM
        # (dominant block); otherwise tile the class dimension.
        tn = C if (2 * D * C * 4) <= (8 << 20) else 1024
    assert C % tn == 0, "num_classes must be a multiple of the class tile"
    if tn != C:
        assert tn % 128 == 0, "class tile must be lane-aligned"

    grid = (C // tn,)
    kernel = functools.partial(_linear_classifier_kernel, embed_dim=D)
    return pl.pallas_call(
        kernel,
        out_shape=jax.ShapeDtypeStruct((B, C), jnp.float32),
        grid_spec=pltpu.PrefetchScalarGridSpec(
            num_scalar_prefetch=0,
            grid=grid,
            in_specs=[
                # Grid-invariant blocks: stay resident across class tiles.
                pl.BlockSpec((B, N, D), lambda j: (0, 0, 0)),    # patch tokens
                pl.BlockSpec((B, D), lambda j: (0, 0)),          # class token
                # Per-class-tile blocks.
                pl.BlockSpec((2 * D, tn), lambda j: (0, j)),     # fused weight
                pl.BlockSpec((1, tn), lambda j: (0, j)),         # bias
            ],
            out_specs=pl.BlockSpec((B, tn), lambda j: (0, j)),
            scratch_shapes=[pltpu.VMEM((B, 2 * D), jnp.float32)],
        ),
        # The feats scratch is written on step 0 and reused on later steps,
        # so the class-tile axis must run sequentially.
        compiler_params=pltpu.CompilerParams(
            dimension_semantics=("arbitrary",)),
    )(patch_tokens, class_token, w_fused, bias2d)


def _reference(patch_tokens, class_token, weight, bias):
    patch_mean = jnp.mean(patch_tokens.astype(jnp.float32), axis=1)
    feats = jnp.concatenate(
        [class_token.astype(jnp.float32), patch_mean], axis=-1)
    return feats @ weight.T + bias


if __name__ == "__main__":
    # Small shapes consistent with the module's forward:
    #   patch tokens [B, N, D], class token [B, D], embed_dim=D, num_classes=C.
    B, N, D, C = 8, 16, 128, 256

    key = jax.random.PRNGKey(0)
    k_patch, k_cls, k_w = jax.random.split(key, 3)

    patch_tokens = jax.random.normal(k_patch, (B, N, D), dtype=jnp.float32)
    class_token = jax.random.normal(k_cls, (B, D), dtype=jnp.float32)

    # Deterministic parameter init mirroring the module's __init__:
    #   weight ~ N(0, 0.01), bias = 0; linear maps 2*embed_dim -> num_classes.
    weight = 0.01 * jax.random.normal(k_w, (C, 2 * D), dtype=jnp.float32)
    bias = jnp.zeros((C,), dtype=jnp.float32)

    # One-time parameter prep (done at model init in a real deployment).
    w_fused, bias2d = prepare_linear_classifier_params(weight, bias, N)

    out = linear_classifier(patch_tokens, class_token, w_fused, bias2d)
    out = jax.block_until_ready(out)

    ref = _reference(patch_tokens, class_token, weight, bias)
    np.testing.assert_allclose(np.asarray(out), np.asarray(ref),
                               rtol=1e-5, atol=1e-5)
    print("KERNEL_OK")
</pallas_src>

<mosaic_0001>
module attributes {stable_mosaic.version = 11 : i64} {
  func.func @_linear_classifier_kernel(%arg0: i32, %arg1: memref<8x16x128xf32, #tpu.memory_space<vmem>>, %arg2: memref<8x128xf32, #tpu.memory_space<vmem>>, %arg3: memref<256x256xf32, #tpu.memory_space<vmem>>, %arg4: memref<1x256xf32, #tpu.memory_space<vmem>>, %arg5: memref<8x256xf32, #tpu.memory_space<vmem>>, %arg6: memref<8x256xf32, #tpu.memory_space<vmem>>) attributes {dimension_semantics = [#tpu.dimension_semantics<arbitrary>], iteration_bounds = array<i64: 1>, scalar_prefetch = 0 : i64, scratch_operands = 1 : i64, tpu.core_type = #tpu.core_type<tc>, window_params = [{pipeline_mode = #tpu.pipeline_mode<synchronous>, transform_indices = @transform_0, window_bounds = array<i64: 8, 16, 128>}, {pipeline_mode = #tpu.pipeline_mode<synchronous>, transform_indices = @transform_1, window_bounds = array<i64: 8, 128>}, {transform_indices = @transform_2, window_bounds = array<i64: 256, 256>}, {transform_indices = @transform_3, window_bounds = array<i64: 1, 256>}, {transform_indices = @transform_4, window_bounds = array<i64: 8, 256>}]} {
    %c0_i32 = arith.constant 0 : i32
    %0 = arith.cmpi eq, %arg0, %c0_i32 : i32
    %1 = arith.extui %0 : i1 to i32
    %c0_i32_0 = arith.constant 0 : i32
    %2 = arith.cmpi ne, %1, %c0_i32_0 : i32
    scf.if %2 {
      %c0_8 = arith.constant 0 : index
      %c0_9 = arith.constant 0 : index
      %10 = vector.load %arg2[%c0_8, %c0_9] : memref<8x128xf32, #tpu.memory_space<vmem>>, vector<8x128xf32>
      %c0_10 = arith.constant 0 : index
      %c0_11 = arith.constant 0 : index
      %11 = vector.load %arg6[%c0_10, %c0_11] : memref<8x256xf32, #tpu.memory_space<vmem>>, vector<8x128xf32>
      tpu.vector_store %arg6[%c0_10, %c0_11], %10 {strides = array<i32>} : memref<8x256xf32, #tpu.memory_space<vmem>>, vector<8x128xf32>,
      %c0_12 = arith.constant 0 : index
      %c0_13 = arith.constant 0 : index
      %c0_14 = arith.constant 0 : index
      %12 = vector.load %arg1[%c0_12, %c0_13, %c0_14] : memref<8x16x128xf32, #tpu.memory_space<vmem>>, vector<8x16x128xf32>
      %cst_15 = arith.constant dense<0.000000e+00> : vector<8x128xf32>
      %13 = vector.multi_reduction <add>, %12, %cst_15 [1] : vector<8x16x128xf32> to vector<8x128xf32>
      %c0_16 = arith.constant 0 : index
      %c128 = arith.constant 128 : index
      %14 = vector.load %arg6[%c0_16, %c128] : memref<8x256xf32, #tpu.memory_space<vmem>>, vector<8x128xf32>
      tpu.vector_store %arg6[%c0_16, %c128], %13 {strides = array<i32>} : memref<8x256xf32, #tpu.memory_space<vmem>>, vector<8x128xf32>,
    } else {
    }
    %c0 = arith.constant 0 : index
    %c0_1 = arith.constant 0 : index
    %3 = vector.load %arg6[%c0, %c0_1] : memref<8x256xf32, #tpu.memory_space<vmem>>, vector<8x256xf32>
    %c0_2 = arith.constant 0 : index
    %c0_3 = arith.constant 0 : index
    %4 = vector.load %arg3[%c0_2, %c0_3] : memref<256x256xf32, #tpu.memory_space<vmem>>, vector<256x256xf32>
    %cst = arith.constant dense<0.000000e+00> : vector<8x256xf32>
    %5 = tpu.matmul %3, %4, %cst {dimension_numbers = #tpu.dot_dimension_numbers<[1], [0], [0], [1], [0, 0, 1, 1], [], []>} : vector<8x256xf32>, vector<256x256xf32>, vector<8x256xf32> -> vector<8x256xf32>
    %c0_4 = arith.constant 0 : index
    %c0_5 = arith.constant 0 : index
    %6 = vector.load %arg4[%c0_4, %c0_5] : memref<1x256xf32, #tpu.memory_space<vmem>>, vector<1x256xf32>
    %7 = vector.broadcast %6 : vector<1x256xf32> to vector<8x256xf32>
    %8 = arith.addf %5, %7 : vector<8x256xf32>
    %c0_6 = arith.constant 0 : index
    %c0_7 = arith.constant 0 : index
    %9 = vector.load %arg5[%c0_6, %c0_7] : memref<8x256xf32, #tpu.memory_space<vmem>>, vector<8x256xf32>
    tpu.vector_store %arg5[%c0_6, %c0_7], %8 {strides = array<i32>} : memref<8x256xf32, #tpu.memory_space<vmem>>, vector<8x256xf32>,
    return
  }
  func.func @transform_0(%arg0: i32) -> (i32, i32, i32) {
    %c0_i32 = arith.constant 0 : i32
    %c0_i32_0 = arith.constant 0 : i32
    %c0_i32_1 = arith.constant 0 : i32
    %c0_i32_2 = arith.constant 0 : i32
    return %c0_i32, %c0_i32_0, %c0_i32_1 : i32, i32, i32
  }
  func.func @transform_1(%arg0: i32) -> (i32, i32) {
    %c0_i32 = arith.constant 0 : i32
    %c0_i32_0 = arith.constant 0 : i32
    %c0_i32_1 = arith.constant 0 : i32
    return %c0_i32, %c0_i32_0 : i32, i32
  }
  func.func @transform_2(%arg0: i32) -> (i32, i32) {
    %c0_i32 = arith.constant 0 : i32
    %c0_i32_0 = arith.constant 0 : i32
    return %c0_i32, %arg0 : i32, i32
  }
  func.func @transform_3(%arg0: i32) -> (i32, i32) {
    %c0_i32 = arith.constant 0 : i32
    %c0_i32_0 = arith.constant 0 : i32
    return %c0_i32, %arg0 : i32, i32
  }
  func.func @transform_4(%arg0: i32) -> (i32, i32) {
    %c0_i32 = arith.constant 0 : i32
    %c0_i32_0 = arith.constant 0 : i32
    return %c0_i32, %arg0 : i32, i32
  }
}

</mosaic_0001>

<llo_original>
// kernel: tpu_custom_call.1
$region0: #{tpu_custom_call.1}
  #allocation0 [shape = 'u32[]', space=smem, size = 0x4, offset = 0x4, fixed_abs, tag = 'smem constant byte address 0x4 - core index']
  #allocation1 [shape = 'u32[72,128]{1,0:T(1,128)}', space=vmem, size = 0x9000, scoped, tag = 'internal scratch']
  #allocation2 [shape = 'f32[8,256]{1,0:T(8,128)}', space=vmem, size = 0x2000, scoped, tag = 'scratch operand']
  %s0 = inlined_call_operand.hbm [shape: f32[8,16,128], index: 0, kind: input, shape index: {}]
  %s1 = inlined_call_operand.hbm [shape: f32[8,128], index: 1, kind: input, shape index: {}]
  %s2 = inlined_call_operand.hbm [shape: f32[256,256], index: 2, kind: input, shape index: {}]
  %s3 = inlined_call_operand.vmem [shape: f32[1,256], index: 3, kind: input, shape index: {}]
  %s4 = inlined_call_operand.hbm [shape: f32[8,256], index: 4, kind: output, shape index: {}]
  %s5 = sld [smem:[#allocation0]]
  $region42: #{tpu_custom_call.1} parent=0
    _
  %s7 = ssub.s32 1, %s5
  %s8 = scalar_select 0, %s7, %s5
  $region1: #{tpu_custom_call.1} parent=0
    #allocation3 [shape = 'u8[65536]{0}', space=vmem, size = 0x10000, scoped, tag = 'input window, operand 0, single buffered']
    #allocation4 [shape = 's32[1]{0}', space=sflag, size = 0x4, scoped, tag = 'scoped memory for tpu_custom_call.1']
    #allocation5 [shape = 's32[1]{0}', space=sflag, size = 0x4, scoped, tag = 'scoped memory for tpu_custom_call.1']
    #allocation6 [shape = 'u8[4096]{0}', space=vmem, size = 0x1000, scoped, tag = 'input window, operand 1, single buffered']
    #allocation7 [shape = 's32[1]{0}', space=sflag, size = 0x4, scoped, tag = 'scoped memory for tpu_custom_call.1']
    #allocation8 [shape = 'u8[262144]{0}', space=vmem, size = 0x40000, scoped, tag = 'input window, operand 2, single buffered']
    #allocation9 [shape = 'u8[8192]{0}', space=vmem, size = 0x2000, scoped, tag = 'output window, operand 0, single buffered']
    %9 = vsyncpa [#allocation4], 0
    %10 = vsyncpa [#allocation7], 0
    %11 = vsyncpa [#allocation5], 0
    // Predicated region
    $region2: #{tpu_custom_call.1} parent=1 // pred_check
      _
    $region3: #{tpu_custom_call.1} parent=1 // pred_check_branch
      %13 = sbr.rel (0) target = $region5
    $region4: #{tpu_custom_call.1} parent=1 // pred_region
      %15 = vsyncadd [#allocation4], 0
      %s16 = sshll.u32 %s0, 4
      %s17 = int_to_ptr.hbm [resolvable:$true] %s16
      %s18 = sshll.u32 [#allocation3], 4
      %s19 = int_to_ptr.vmem [resolvable:$true] %s18
      %24 = dma.hbm_to_vmem [thread:$0]  %s17, 2048, %s19, [#allocation4], 128, 128, 8
    $region5: #{tpu_custom_call.1} parent=1 // pred_fallthru
      _
    // Predicated region
    $region6: #{tpu_custom_call.1} parent=1 // pred_check
      _
    $region7: #{tpu_custom_call.1} parent=1 // pred_check_branch
      %26 = sbr.rel (0) target = $region9
    $region8: #{tpu_custom_call.1} parent=1 // pred_region
      %28 = vsyncadd [#allocation7], 0
      %s30 = sshll.u32 %s1, 4
      %s31 = int_to_ptr.hbm [resolvable:$true] %s30
      %s32 = sshll.u32 [#allocation6], 4
      %s33 = int_to_ptr.vmem [resolvable:$true] %s32
      %35 = dma.hbm_to_vmem [thread:$0]  %s31, 128, %s33, [#allocation7]
    $region9: #{tpu_custom_call.1} parent=1 // pred_fallthru
      _
    // Predicated region
    $region10: #{tpu_custom_call.1} parent=1 // pred_check
      _
    $region11: #{tpu_custom_call.1} parent=1 // pred_check_branch
      %37 = sbr.rel (0) target = $region13
    $region12: #{tpu_custom_call.1} parent=1 // pred_region
      %39 = vsyncadd [#allocation7], 0
      %s40 = sshll.u32 %s2, 4
      %s41 = int_to_ptr.hbm [resolvable:$true] %s40
      %s42 = sshll.u32 [#allocation8], 4
      %s43 = int_to_ptr.vmem [resolvable:$true] %s42
      %48 = dma.hbm_to_vmem [thread:$0]  %s41, 8192, %s43, [#allocation7], 256, 256, 16
    $region13: #{tpu_custom_call.1} parent=1 // pred_fallthru
      _
    // Predicated region
    $region14: #{tpu_custom_call.1} parent=1 // pred_check
      _
    $region15: #{tpu_custom_call.1} parent=1 // pred_check_branch
      %50 = sbr.rel (0) target = $region17
    $region16: #{tpu_custom_call.1} parent=1 // pred_region
      _
    $region17: #{tpu_custom_call.1} parent=1 // pred_fallthru
      _
    // Predicated region
    $region18: #{tpu_custom_call.1} parent=1 // pred_check
      _
    $region19: #{tpu_custom_call.1} parent=1 // pred_check_branch
      %52 = sbr.rel (0) target = $region21
    $region20: #{tpu_custom_call.1} parent=1 // pred_region
      %54 = dma.done [#allocation4], 2048
    $region21: #{tpu_custom_call.1} parent=1 // pred_fallthru
      _
    // Predicated region
    $region22: #{tpu_custom_call.1} parent=1 // pred_check
      _
    $region23: #{tpu_custom_call.1} parent=1 // pred_check_branch
      %56 = sbr.rel (0) target = $region25
    $region24: #{tpu_custom_call.1} parent=1 // pred_region
      %58 = dma.done [#allocation7], 128
    $region25: #{tpu_custom_call.1} parent=1 // pred_fallthru
      _
    // Predicated region
    $region26: #{tpu_custom_call.1} parent=1 // pred_check
      _
    $region27: #{tpu_custom_call.1} parent=1 // pred_check_branch
      %60 = sbr.rel (0) target = $region29
    $region28: #{tpu_custom_call.1} parent=1 // pred_region
      %62 = dma.done [#allocation7], 8192
    $region29: #{tpu_custom_call.1} parent=1 // pred_fallthru
      _
    %p63 = scmp.eq.s32.totalorder 0, 0
    // Predicated region
    $region30: #{tpu_custom_call.1} parent=1 // pred_check
      %p64 = pneg %p63
    $region31: #{tpu_custom_call.1} parent=1 // pred_check_branch
      %66 = sbr.rel (%p64) target = $region33
    $region32: #{tpu_custom_call.1} parent=1 // pred_region
      %v67 = vld [vmem:[#allocation6] sm:$0xff]
      %68 = vst [vmem:[#allocation2] sm:$0xff] %v67
      %v69 = vld [vmem:[#allocation3] sm:$0xff]
      %v70 = vld [vmem:[#allocation3 + $0x8] sm:$0xff]
      %v71 = vld [vmem:[#allocation3 + $0x10] sm:$0xff]
      %v72 = vld [vmem:[#allocation3 + $0x18] sm:$0xff]
      %v73 = vld [vmem:[#allocation3 + $0x20] sm:$0xff]
      %v74 = vld [vmem:[#allocation3 + $0x28] sm:$0xff]
      %v75 = vld [vmem:[#allocation3 + $0x30] sm:$0xff]
      %v76 = vld [vmem:[#allocation3 + $0x38] sm:$0xff]
      %v77 = vld [vmem:[#allocation3 + $0x40] sm:$0xff]
      %v78 = vld [vmem:[#allocation3 + $0x48] sm:$0xff]
      %v79 = vld [vmem:[#allocation3 + $0x50] sm:$0xff]
      %v80 = vld [vmem:[#allocation3 + $0x58] sm:$0xff]
      %v81 = vld [vmem:[#allocation3 + $0x60] sm:$0xff]
      %v82 = vld [vmem:[#allocation3 + $0x68] sm:$0xff]
      %v83 = vld [vmem:[#allocation3 + $0x70] sm:$0xff]
      %v84 = vld [vmem:[#allocation3 + $0x78] sm:$0xff]
      %v85 = vadd.f32 %v69, %v70
      %v86 = vrot.slane %v85, 4
      %v87 = vadd.f32 %v85, %v86
      %v88 = vrot.slane %v87, 2
      %v89 = vadd.f32 %v87, %v88
      %v90 = vrot.slane %v89, 1
      %v91 = vadd.f32 %v89, %v90
      %v92 = vadd.f32 %v71, %v72
      %v93 = vrot.slane %v92, 4
      %v94 = vadd.f32 %v92, %v93
      %v95 = vrot.slane %v94, 2
      %v96 = vadd.f32 %v94, %v95
      %v97 = vrot.slane %v96, 1
      %v98 = vadd.f32 %v96, %v97
      %v99 = vadd.f32 %v73, %v74
      %v100 = vrot.slane %v99, 4
      %v101 = vadd.f32 %v99, %v100
      %v102 = vrot.slane %v101, 2
      %v103 = vadd.f32 %v101, %v102
      %v104 = vrot.slane %v103, 1
      %v105 = vadd.f32 %v103, %v104
      %v106 = vadd.f32 %v75, %v76
      %v107 = vrot.slane %v106, 4
      %v108 = vadd.f32 %v106, %v107
      %v109 = vrot.slane %v108, 2
      %v110 = vadd.f32 %v108, %v109
      %v111 = vrot.slane %v110, 1
      %v112 = vadd.f32 %v110, %v111
      %v113 = vadd.f32 %v77, %v78
      %v114 = vrot.slane %v113, 4
      %v115 = vadd.f32 %v113, %v114
      %v116 = vrot.slane %v115, 2
      %v117 = vadd.f32 %v115, %v116
      %v118 = vrot.slane %v117, 1
      %v119 = vadd.f32 %v117, %v118
      %v120 = vadd.f32 %v79, %v80
      %v121 = vrot.slane %v120, 4
      %v122 = vadd.f32 %v120, %v121
      %v123 = vrot.slane %v122, 2
      %v124 = vadd.f32 %v122, %v123
      %v125 = vrot.slane %v124, 1
      %v126 = vadd.f32 %v124, %v125
      %v127 = vadd.f32 %v81, %v82
      %v128 = vrot.slane %v127, 4
      %v129 = vadd.f32 %v127, %v128
      %v130 = vrot.slane %v129, 2
      %v131 = vadd.f32 %v129, %v130
      %v132 = vrot.slane %v131, 1
      %v133 = vadd.f32 %v131, %v132
      %v134 = vadd.f32 %v83, %v84
      %v135 = vrot.slane %v134, 4
      %v136 = vadd.f32 %v134, %v135
      %v137 = vrot.slane %v136, 2
      %v138 = vadd.f32 %v136, %v137
      %v139 = vrot.slane %v138, 1
      %v140 = vadd.f32 %v138, %v139
      %vm149 = vcmask 1041409
      %v150 = vsel %vm149, %v98, %v91
      %vm151 = vcmask 1042434
      %v152 = vsel %vm151, %v105, %v150
      %vm153 = vcmask 1043459
      %v154 = vsel %vm153, %v112, %v152
      %vm155 = vcmask 1044484
      %v156 = vsel %vm155, %v119, %v154
      %vm157 = vcmask 1045509
      %v158 = vsel %vm157, %v126, %v156
      %vm159 = vcmask 1046534
      %v160 = vsel %vm159, %v133, %v158
      %vm161 = vcmask 1047559
      %v162 = vsel %vm161, %v140, %v160
      %164 = vst [vmem:[#allocation2 + $0x8] sm:$0xff] %v162
    $region33: #{tpu_custom_call.1} parent=1 // pred_fallthru
      _
    %v165 = vld [vmem:[#allocation2] sm:$0xff]
    %v166 = vld [vmem:[#allocation2 + $0x8] sm:$0xff]
    %v167 = vld [vmem:[#allocation8] sm:$0xff]
    %v168 = vld [vmem:[#allocation8 + $0x8] sm:$0xff]
    %v169 = vld [vmem:[#allocation8 + $0x10] sm:$0xff]
    %v170 = vld [vmem:[#allocation8 + $0x18] sm:$0xff]
    %v171 = vld [vmem:[#allocation8 + $0x20] sm:$0xff]
    %v172 = vld [vmem:[#allocation8 + $0x28] sm:$0xff]
    %v173 = vld [vmem:[#allocation8 + $0x30] sm:$0xff]
    %v174 = vld [vmem:[#allocation8 + $0x38] sm:$0xff]
    %v175 = vld [vmem:[#allocation8 + $0x40] sm:$0xff]
    %v176 = vld [vmem:[#allocation8 + $0x48] sm:$0xff]
    %v177 = vld [vmem:[#allocation8 + $0x50] sm:$0xff]
    %v178 = vld [vmem:[#allocation8 + $0x58] sm:$0xff]
    %v179 = vld [vmem:[#allocation8 + $0x60] sm:$0xff]
    %v180 = vld [vmem:[#allocation8 + $0x68] sm:$0xff]
    %v181 = vld [vmem:[#allocation8 + $0x70] sm:$0xff]
    %v182 = vld [vmem:[#allocation8 + $0x78] sm:$0xff]
    %v183 = vld [vmem:[#allocation8 + $0x80] sm:$0xff]
    %v184 = vld [vmem:[#allocation8 + $0x88] sm:$0xff]
    %v185 = vld [vmem:[#allocation8 + $0x90] sm:$0xff]
    %v186 = vld [vmem:[#allocation8 + $0x98] sm:$0xff]
    %v187 = vld [vmem:[#allocation8 + $0xa0] sm:$0xff]
    %v188 = vld [vmem:[#allocation8 + $0xa8] sm:$0xff]
    %v189 = vld [vmem:[#allocation8 + $0xb0] sm:$0xff]
    %v190 = vld [vmem:[#allocation8 + $0xb8] sm:$0xff]
    %v191 = vld [vmem:[#allocation8 + $0xc0] sm:$0xff]
    %v192 = vld [vmem:[#allocation8 + $0xc8] sm:$0xff]
    %v193 = vld [vmem:[#allocation8 + $0xd0] sm:$0xff]
    %v194 = vld [vmem:[#allocation8 + $0xd8] sm:$0xff]
    %v195 = vld [vmem:[#allocation8 + $0xe0] sm:$0xff]
    %v196 = vld [vmem:[#allocation8 + $0xe8] sm:$0xff]
    %v197 = vld [vmem:[#allocation8 + $0xf0] sm:$0xff]
    %v198 = vld [vmem:[#allocation8 + $0xf8] sm:$0xff]
    %v199 = vld [vmem:[#allocation8 + $0x100] sm:$0xff]
    %v200 = vld [vmem:[#allocation8 + $0x108] sm:$0xff]
    %v201 = vld [vmem:[#allocation8 + $0x110] sm:$0xff]
    %v202 = vld [vmem:[#allocation8 + $0x118] sm:$0xff]
    %v203 = vld [vmem:[#allocation8 + $0x120] sm:$0xff]
    %v204 = vld [vmem:[#allocation8 + $0x128] sm:$0xff]
    %v205 = vld [vmem:[#allocation8 + $0x130] sm:$0xff]
    %v206 = vld [vmem:[#allocation8 + $0x138] sm:$0xff]
    %v207 = vld [vmem:[#allocation8 + $0x140] sm:$0xff]
    %v208 = vld [vmem:[#allocation8 + $0x148] sm:$0xff]
    %v209 = vld [vmem:[#allocation8 + $0x150] sm:$0xff]
    %v210 = vld [vmem:[#allocation8 + $0x158] sm:$0xff]
    %v211 = vld [vmem:[#allocation8 + $0x160] sm:$0xff]
    %v212 = vld [vmem:[#allocation8 + $0x168] sm:$0xff]
    %v213 = vld [vmem:[#allocation8 + $0x170] sm:$0xff]
    %v214 = vld [vmem:[#allocation8 + $0x178] sm:$0xff]
    %v215 = vld [vmem:[#allocation8 + $0x180] sm:$0xff]
    %v216 = vld [vmem:[#allocation8 + $0x188] sm:$0xff]
    %v217 = vld [vmem:[#allocation8 + $0x190] sm:$0xff]
    %v218 = vld [vmem:[#allocation8 + $0x198] sm:$0xff]
    %v219 = vld [vmem:[#allocation8 + $0x1a0] sm:$0xff]
    %v220 = vld [vmem:[#allocation8 + $0x1a8] sm:$0xff]
    %v221 = vld [vmem:[#allocation8 + $0x1b0] sm:$0xff]
    %v222 = vld [vmem:[#allocation8 + $0x1b8] sm:$0xff]
    %v223 = vld [vmem:[#allocation8 + $0x1c0] sm:$0xff]
    %v224 = vld [vmem:[#allocation8 + $0x1c8] sm:$0xff]
    %v225 = vld [vmem:[#allocation8 + $0x1d0] sm:$0xff]
    %v226 = vld [vmem:[#allocation8 + $0x1d8] sm:$0xff]
    %v227 = vld [vmem:[#allocation8 + $0x1e0] sm:$0xff]
    %v228 = vld [vmem:[#allocation8 + $0x1e8] sm:$0xff]
    %v229 = vld [vmem:[#allocation8 + $0x1f0] sm:$0xff]
    %v230 = vld [vmem:[#allocation8 + $0x1f8] sm:$0xff]
    %v231 = vld [vmem:[%s3] sm:$0x3]
    %v233 = vperm.slane %v231, 0
    %v234 = vperm.slane %v231, 1
    %237 = vmatpush.msra.mxu0 %v197
    %238 = vmatpush.msra.mxu0 %v195
    %239 = vmatpush.msra.mxu0 %v193
    %240 = vmatpush.msra.mxu0 %v191
    %241 = vmatpush.msra.mxu0 %v189
    %242 = vmatpush.msra.mxu0 %v187
    %243 = vmatpush.msra.mxu0 %v185
    %244 = vmatpush.msra.mxu0 %v183
    %245 = vmatpush.msra.mxu0 %v181
    %246 = vmatpush.msra.mxu0 %v179
    %247 = vmatpush.msra.mxu0 %v177
    %248 = vmatpush.msra.mxu0 %v175
    %249 = vmatpush.msra.mxu0 %v173
    %250 = vmatpush.msra.mxu0 %v171
    %251 = vmatpush.msra.mxu0 %v169
    %252 = vmatpush.msra.mxu0 %v167
    %253 = vmatmul.f32.gmra.mxu0 %v165
    %v254 = vpop.f32.mrf.mxu0
    %v255 = vadd.f32 %v233, %v254
    %256 = vdwg.mxu0
    %257 = vmatpush.msra.mxu0 %v229
    %258 = vmatpush.msra.mxu0 %v227
    %259 = vmatpush.msra.mxu0 %v225
    %260 = vmatpush.msra.mxu0 %v223
    %261 = vmatpush.msra.mxu0 %v221
    %262 = vmatpush.msra.mxu0 %v219
    %263 = vmatpush.msra.mxu0 %v217
    %264 = vmatpush.msra.mxu0 %v215
    %265 = vmatpush.msra.mxu0 %v213
    %266 = vmatpush.msra.mxu0 %v211
    %267 = vmatpush.msra.mxu0 %v209
    %268 = vmatpush.msra.mxu0 %v207
    %269 = vmatpush.msra.mxu0 %v205
    %270 = vmatpush.msra.mxu0 %v203
    %271 = vmatpush.msra.mxu0 %v201
    %272 = vmatpush.msra.mxu0 %v199
    %273 = vmatmul.f32.gmra.mxu0 %v166
    %v274 = vpop.f32.mrf.mxu0
    %v275 = vadd.f32 %v255, %v274
    %276 = vdwg.mxu0
    %277 = vmatpush.msra.mxu0 %v198
    %278 = vmatpush.msra.mxu0 %v196
    %279 = vmatpush.msra.mxu0 %v194
    %280 = vmatpush.msra.mxu0 %v192
    %281 = vmatpush.msra.mxu0 %v190
    %282 = vmatpush.msra.mxu0 %v188
    %283 = vmatpush.msra.mxu0 %v186
    %284 = vmatpush.msra.mxu0 %v184
    %285 = vmatpush.msra.mxu0 %v182
    %286 = vmatpush.msra.mxu0 %v180
    %287 = vmatpush.msra.mxu0 %v178
    %288 = vmatpush.msra.mxu0 %v176
    %289 = vmatpush.msra.mxu0 %v174
    %290 = vmatpush.msra.mxu0 %v172
    %291 = vmatpush.msra.mxu0 %v170
    %292 = vmatpush.msra.mxu0 %v168
    %293 = vmatmul.f32.gmra.mxu0 %v165
    %v294 = vpop.f32.mrf.mxu0
    %v295 = vadd.f32 %v234, %v294
    %296 = vdwg.mxu0
    %297 = vmatpush.msra.mxu0 %v230
    %298 = vmatpush.msra.mxu0 %v228
    %299 = vmatpush.msra.mxu0 %v226
    %300 = vmatpush.msra.mxu0 %v224
    %301 = vmatpush.msra.mxu0 %v222
    %302 = vmatpush.msra.mxu0 %v220
    %303 = vmatpush.msra.mxu0 %v218
    %304 = vmatpush.msra.mxu0 %v216
    %305 = vmatpush.msra.mxu0 %v214
    %306 = vmatpush.msra.mxu0 %v212
    %307 = vmatpush.msra.mxu0 %v210
    %308 = vmatpush.msra.mxu0 %v208
    %309 = vmatpush.msra.mxu0 %v206
    %310 = vmatpush.msra.mxu0 %v204
    %311 = vmatpush.msra.mxu0 %v202
    %312 = vmatpush.msra.mxu0 %v200
    %313 = vmatmul.f32.gmra.mxu0 %v166
    %v314 = vpop.f32.mrf.mxu0
    %v315 = vadd.f32 %v295, %v314
    %316 = vdwg.mxu0
    %317 = vst [vmem:[#allocation9] sm:$0xff] %v275
    %318 = vst [vmem:[#allocation9 + $0x8] sm:$0xff] %v315
    // Predicated region
    $region34: #{tpu_custom_call.1} parent=1 // pred_check
      _
    $region35: #{tpu_custom_call.1} parent=1 // pred_check_branch
      %320 = sbr.rel (0) target = $region37
    $region36: #{tpu_custom_call.1} parent=1 // pred_region
      %322 = vsyncadd [#allocation5], 0
      %s324 = sshll.u32 [#allocation9], 4
      %s325 = int_to_ptr.vmem [resolvable:$true] %s324
      %s326 = sshll.u32 %s4, 4
      %s327 = int_to_ptr.hbm [resolvable:$true] %s326
      %329 = dma.vmem_to_hbm [thread:$0]  %s325, 256, %s327, [#allocation5]
    $region37: #{tpu_custom_call.1} parent=1 // pred_fallthru
      _
    // Predicated region
    $region38: #{tpu_custom_call.1} parent=1 // pred_check
      _
    $region39: #{tpu_custom_call.1} parent=1 // pred_check_branch
      %331 = sbr.rel (0) target = $region41
    $region40: #{tpu_custom_call.1} parent=1 // pred_region
      %333 = dma.done [#allocation5], 256
    $region41: #{tpu_custom_call.1} parent=1 // pred_fallthru
      _
    %334 = vsyncpa [#allocation4], 1
    %335 = vsyncpa [#allocation7], 1
    %336 = vsyncpa [#allocation5], 1

</llo_original>
